<compile_context>
chip_gen: v7x
topology: tpu7x:2x2x1
jax: 0.10.0
libtpu: 0.0.40
codegen_flags: <defaults>
</compile_context>

<pallas_src>
import functools

import jax
import jax.numpy as jnp
from jax.experimental import pallas as pl
from jax.experimental.pallas import tpu as pltpu


def _round_up(x, m):
    return ((x + m - 1) // m) * m


def _actor_mlp_kernel(x_ref, w1_ref, b1_ref, w2_ref, b2_ref, w3_ref, b3_ref,
                      out_ref):
    """Fused 3-layer MLP on one (TB, state_dim) batch tile.

    The f32 state tile is cast to bf16 in-kernel (MXU-native inputs),
    accumulation / bias-add / tanh stay in f32 (v5e-safe). Weights/biases are
    VMEM-resident across all grid steps (constant index_map). The output tile
    is the true (TB, action_dim) slab — no lane padding.
    """
    x = x_ref[...].astype(jnp.bfloat16)                       # (TB, S) bf16

    # Layer 1: Linear + Tanh
    h1 = jnp.dot(x, w1_ref[...], preferred_element_type=jnp.float32)
    h1 = jnp.tanh(h1 + b1_ref[...])                           # f32 (TB, H)

    # Layer 2: Linear + Tanh
    h2 = jnp.dot(h1.astype(jnp.bfloat16), w2_ref[...],
                 preferred_element_type=jnp.float32)
    h2 = jnp.tanh(h2 + b2_ref[...])                           # f32 (TB, H)

    # Layer 3: Linear (std=0.01 init handled outside the kernel)
    out = jnp.dot(h2.astype(jnp.bfloat16), w3_ref[...],
                  preferred_element_type=jnp.float32)
    out_ref[...] = (out + b3_ref[...]).astype(out_ref.dtype)  # (TB, A)


@functools.partial(jax.jit, static_argnames=("block_batch",))
def actor_forward(state, params, block_batch=8192):
    """Actor forward pass via a batch-tiled pallas_call.

    state : (B, state_dim) float32
    params: dict with w1 (S,H), b1 (1,H), w2 (H,H), b2 (1,H),
            w3 (H,A), b3 (1,A)   -- all float32
    """
    w1, b1 = params["w1"], params["b1"]
    w2, b2 = params["w2"], params["b2"]
    w3, b3 = params["w3"], params["b3"]

    batch, state_dim = state.shape
    hidden = w1.shape[1]
    action_dim = w3.shape[1]

    # --- Batch tile sizing ----------------------------------------------------
    block_batch = max(16, _round_up(block_batch, 16))
    if batch > block_batch:
        tb = block_batch
    elif batch > 16:
        # Whole batch fits in one block: split into (at least) 2 grid steps so
        # v7x's 2 TensorCores both get work (no-op cost on v5e/v6e).
        tb = _round_up((batch + 1) // 2, 16)
    else:
        tb = _round_up(batch, 8)
    padded_batch = _round_up(batch, tb)
    nb = padded_batch // tb

    # Only pad when necessary (no wrapper-side dtype cast: that happens in-kernel).
    x = state
    if padded_batch != batch:
        x = jnp.pad(x, ((0, padded_batch - batch), (0, 0)))

    # Double-buffered f32 input / output tiles + resident bf16 weights + f32
    # intermediates stay well under this on every generation (v5e/v6e/v7x).
    vmem_limit = 32 * 1024 * 1024

    out = pl.pallas_call(
        _actor_mlp_kernel,
        out_shape=jax.ShapeDtypeStruct((padded_batch, action_dim), jnp.float32),
        grid=(nb,),
        in_specs=[
            pl.BlockSpec((tb, state_dim), lambda i: (i, 0)),       # streamed
            pl.BlockSpec((state_dim, hidden), lambda i: (0, 0)),   # resident
            pl.BlockSpec((1, hidden), lambda i: (0, 0)),
            pl.BlockSpec((hidden, hidden), lambda i: (0, 0)),
            pl.BlockSpec((1, hidden), lambda i: (0, 0)),
            pl.BlockSpec((hidden, action_dim), lambda i: (0, 0)),
            pl.BlockSpec((1, action_dim), lambda i: (0, 0)),
        ],
        out_specs=pl.BlockSpec((tb, action_dim), lambda i: (i, 0)),
        compiler_params=pltpu.CompilerParams(
            dimension_semantics=("parallel",),   # megacore on v7x
            vmem_limit_bytes=vmem_limit,
        ),
    )(x,
      w1.astype(jnp.bfloat16), b1,
      w2.astype(jnp.bfloat16), b2,
      w3.astype(jnp.bfloat16), b3)

    if padded_batch != batch:
        out = out[:batch]
    return out


def _orthogonal(key, shape, gain):
    """Deterministic orthogonal init (matches torch.nn.init.orthogonal_ semantics)."""
    rows, cols = shape
    flat = jax.random.normal(key, (max(rows, cols), min(rows, cols)),
                             dtype=jnp.float32)
    q, r = jnp.linalg.qr(flat)
    d = jnp.diagonal(r)
    q = q * jnp.where(d >= 0, 1.0, -1.0)[None, :]   # robust sign correction
    if rows < cols:
        q = q.T
    return gain * q[:rows, :cols]


def init_actor_params(key, state_dim, hidden_size, action_dim):
    k1, k2, k3 = jax.random.split(key, 3)
    sqrt2 = float(jnp.sqrt(2.0))
    # PyTorch Linear weight is (out, in); orthogonal_ is applied to that shape.
    # We store the transpose (in, out) for the kernel's x @ W convention.
    w1 = _orthogonal(k1, (hidden_size, state_dim), sqrt2).T
    w2 = _orthogonal(k2, (hidden_size, hidden_size), sqrt2).T
    w3 = _orthogonal(k3, (action_dim, hidden_size), 0.01).T
    return {
        "w1": w1, "b1": jnp.zeros((1, hidden_size), jnp.float32),
        "w2": w2, "b2": jnp.zeros((1, hidden_size), jnp.float32),
        "w3": w3, "b3": jnp.zeros((1, action_dim), jnp.float32),
    }


def actor_forward_ref(state, params):
    """Pure-JAX f32 reference (mirrors the torch nn.Sequential)."""
    h = jnp.tanh(state @ params["w1"] + params["b1"])
    h = jnp.tanh(h @ params["w2"] + params["b2"])
    return h @ params["w3"] + params["b3"]


if __name__ == "__main__":
    # Small shapes consistent with the module: Actor(state_dim, action_dim, hidden_size)
    # adaptive_std=False -> action_dim stays as-is; self.logstd is unused in forward().
    state_dim, hidden_size, action_dim = 16, 32, 4

    key = jax.random.PRNGKey(0)
    k_params, k_state1, k_state2 = jax.random.split(key, 3)
    params = init_actor_params(k_params, state_dim, hidden_size, action_dim)

    # 1) Small demo batch (single grid step, no padding needed).
    batch = 8
    state = jax.random.normal(k_state1, (batch, state_dim), dtype=jnp.float32)
    out = jax.block_until_ready(actor_forward(state, params))
    ref = actor_forward_ref(state, params)
    assert out.shape == (batch, action_dim), out.shape
    assert jnp.allclose(out, ref, atol=2e-2, rtol=2e-2), (
        "mismatch vs reference (small batch): "
        f"max abs diff = {float(jnp.max(jnp.abs(out - ref)))}")

    # 2) Multi-block batch exercising the pipelined grid + pad/slice path.
    batch2 = 1000
    state2 = jax.random.normal(k_state2, (batch2, state_dim), dtype=jnp.float32)
    out2 = jax.block_until_ready(actor_forward(state2, params, block_batch=256))
    ref2 = actor_forward_ref(state2, params)
    assert out2.shape == (batch2, action_dim), out2.shape
    assert jnp.allclose(out2, ref2, atol=2e-2, rtol=2e-2), (
        "mismatch vs reference (tiled batch): "
        f"max abs diff = {float(jnp.max(jnp.abs(out2 - ref2)))}")

    # 3) Single-block-sized batch: exercises the >=2 grid-step split path.
    batch3 = 96
    state3 = jax.random.normal(k_state2, (batch3, state_dim), dtype=jnp.float32)
    out3 = jax.block_until_ready(actor_forward(state3, params))
    ref3 = actor_forward_ref(state3, params)
    assert out3.shape == (batch3, action_dim), out3.shape
    assert jnp.allclose(out3, ref3, atol=2e-2, rtol=2e-2), (
        "mismatch vs reference (split batch): "
        f"max abs diff = {float(jnp.max(jnp.abs(out3 - ref3)))}")

    print("KERNEL_OK")
</pallas_src>

<mosaic_0001>
module attributes {stable_mosaic.version = 11 : i64} {
  func.func @_actor_mlp_kernel(%arg0: i32, %arg1: memref<8x16xf32, #tpu.memory_space<vmem>>, %arg2: memref<16x32xbf16, #tpu.memory_space<vmem>>, %arg3: memref<1x32xf32, #tpu.memory_space<vmem>>, %arg4: memref<32x32xbf16, #tpu.memory_space<vmem>>, %arg5: memref<1x32xf32, #tpu.memory_space<vmem>>, %arg6: memref<32x4xbf16, #tpu.memory_space<vmem>>, %arg7: memref<1x4xf32, #tpu.memory_space<vmem>>, %arg8: memref<8x4xf32, #tpu.memory_space<vmem>>) attributes {dimension_semantics = [#tpu.dimension_semantics<parallel>], iteration_bounds = array<i64: 1>, scalar_prefetch = 0 : i64, scratch_operands = 0 : i64, tpu.core_type = #tpu.core_type<tc>, window_params = [{transform_indices = @transform_0, window_bounds = array<i64: 8, 16>}, {pipeline_mode = #tpu.pipeline_mode<synchronous>, transform_indices = @transform_1, window_bounds = array<i64: 16, 32>}, {pipeline_mode = #tpu.pipeline_mode<synchronous>, transform_indices = @transform_2, window_bounds = array<i64: 1, 32>}, {pipeline_mode = #tpu.pipeline_mode<synchronous>, transform_indices = @transform_3, window_bounds = array<i64: 32, 32>}, {pipeline_mode = #tpu.pipeline_mode<synchronous>, transform_indices = @transform_4, window_bounds = array<i64: 1, 32>}, {pipeline_mode = #tpu.pipeline_mode<synchronous>, transform_indices = @transform_5, window_bounds = array<i64: 32, 4>}, {pipeline_mode = #tpu.pipeline_mode<synchronous>, transform_indices = @transform_6, window_bounds = array<i64: 1, 4>}, {transform_indices = @transform_7, window_bounds = array<i64: 8, 4>}]} {
    %c0 = arith.constant 0 : index
    %c0_0 = arith.constant 0 : index
    %0 = vector.load %arg1[%c0, %c0_0] : memref<8x16xf32, #tpu.memory_space<vmem>>, vector<8x16xf32>
    %1 = arith.truncf %0 : vector<8x16xf32> to vector<8x16xbf16>
    %c0_1 = arith.constant 0 : index
    %c0_2 = arith.constant 0 : index
    %2 = vector.load %arg2[%c0_1, %c0_2] : memref<16x32xbf16, #tpu.memory_space<vmem>>, vector<16x32xbf16>
    %cst = arith.constant dense<0.000000e+00> : vector<8x32xf32>
    %3 = tpu.matmul %1, %2, %cst {dimension_numbers = #tpu.dot_dimension_numbers<[1], [0], [0], [1], [0, 0, 1, 1], [], []>} : vector<8x16xbf16>, vector<16x32xbf16>, vector<8x32xf32> -> vector<8x32xf32>
    %c0_3 = arith.constant 0 : index
    %c0_4 = arith.constant 0 : index
    %4 = vector.load %arg3[%c0_3, %c0_4] : memref<1x32xf32, #tpu.memory_space<vmem>>, vector<1x32xf32>
    %5 = vector.broadcast %4 : vector<1x32xf32> to vector<8x32xf32>
    %6 = arith.addf %3, %5 : vector<8x32xf32>
    %7 = math.tanh %6 : vector<8x32xf32>
    %8 = arith.truncf %7 : vector<8x32xf32> to vector<8x32xbf16>
    %c0_5 = arith.constant 0 : index
    %c0_6 = arith.constant 0 : index
    %9 = vector.load %arg4[%c0_5, %c0_6] : memref<32x32xbf16, #tpu.memory_space<vmem>>, vector<32x32xbf16>
    %cst_7 = arith.constant dense<0.000000e+00> : vector<8x32xf32>
    %10 = tpu.matmul %8, %9, %cst_7 {dimension_numbers = #tpu.dot_dimension_numbers<[1], [0], [0], [1], [0, 0, 1, 1], [], []>} : vector<8x32xbf16>, vector<32x32xbf16>, vector<8x32xf32> -> vector<8x32xf32>
    %c0_8 = arith.constant 0 : index
    %c0_9 = arith.constant 0 : index
    %11 = vector.load %arg5[%c0_8, %c0_9] : memref<1x32xf32, #tpu.memory_space<vmem>>, vector<1x32xf32>
    %12 = vector.broadcast %11 : vector<1x32xf32> to vector<8x32xf32>
    %13 = arith.addf %10, %12 : vector<8x32xf32>
    %14 = math.tanh %13 : vector<8x32xf32>
    %15 = arith.truncf %14 : vector<8x32xf32> to vector<8x32xbf16>
    %c0_10 = arith.constant 0 : index
    %c0_11 = arith.constant 0 : index
    %16 = vector.load %arg6[%c0_10, %c0_11] : memref<32x4xbf16, #tpu.memory_space<vmem>>, vector<32x4xbf16>
    %cst_12 = arith.constant dense<0.000000e+00> : vector<8x4xf32>
    %17 = tpu.matmul %15, %16, %cst_12 {dimension_numbers = #tpu.dot_dimension_numbers<[1], [0], [0], [1], [0, 0, 1, 1], [], []>} : vector<8x32xbf16>, vector<32x4xbf16>, vector<8x4xf32> -> vector<8x4xf32>
    %c0_13 = arith.constant 0 : index
    %c0_14 = arith.constant 0 : index
    %18 = vector.load %arg7[%c0_13, %c0_14] : memref<1x4xf32, #tpu.memory_space<vmem>>, vector<1x4xf32>
    %19 = vector.broadcast %18 : vector<1x4xf32> to vector<8x4xf32>
    %20 = arith.addf %17, %19 : vector<8x4xf32>
    %c0_15 = arith.constant 0 : index
    %c0_16 = arith.constant 0 : index
    %21 = vector.load %arg8[%c0_15, %c0_16] : memref<8x4xf32, #tpu.memory_space<vmem>>, vector<8x4xf32>
    tpu.vector_store %arg8[%c0_15, %c0_16], %20 {strides = array<i32>} : memref<8x4xf32, #tpu.memory_space<vmem>>, vector<8x4xf32>,
    return
  }
  func.func @transform_0(%arg0: i32) -> (i32, i32) {
    %c0_i32 = arith.constant 0 : i32
    %c0_i32_0 = arith.constant 0 : i32
    return %arg0, %c0_i32 : i32, i32
  }
  func.func @transform_1(%arg0: i32) -> (i32, i32) {
    %c0_i32 = arith.constant 0 : i32
    %c0_i32_0 = arith.constant 0 : i32
    %c0_i32_1 = arith.constant 0 : i32
    return %c0_i32, %c0_i32_0 : i32, i32
  }
  func.func @transform_2(%arg0: i32) -> (i32, i32) {
    %c0_i32 = arith.constant 0 : i32
    %c0_i32_0 = arith.constant 0 : i32
    %c0_i32_1 = arith.constant 0 : i32
    return %c0_i32, %c0_i32_0 : i32, i32
  }
  func.func @transform_3(%arg0: i32) -> (i32, i32) {
    %c0_i32 = arith.constant 0 : i32
    %c0_i32_0 = arith.constant 0 : i32
    %c0_i32_1 = arith.constant 0 : i32
    return %c0_i32, %c0_i32_0 : i32, i32
  }
  func.func @transform_4(%arg0: i32) -> (i32, i32) {
    %c0_i32 = arith.constant 0 : i32
    %c0_i32_0 = arith.constant 0 : i32
    %c0_i32_1 = arith.constant 0 : i32
    return %c0_i32, %c0_i32_0 : i32, i32
  }
  func.func @transform_5(%arg0: i32) -> (i32, i32) {
    %c0_i32 = arith.constant 0 : i32
    %c0_i32_0 = arith.constant 0 : i32
    %c0_i32_1 = arith.constant 0 : i32
    return %c0_i32, %c0_i32_0 : i32, i32
  }
  func.func @transform_6(%arg0: i32) -> (i32, i32) {
    %c0_i32 = arith.constant 0 : i32
    %c0_i32_0 = arith.constant 0 : i32
    %c0_i32_1 = arith.constant 0 : i32
    return %c0_i32, %c0_i32_0 : i32, i32
  }
  func.func @transform_7(%arg0: i32) -> (i32, i32) {
    %c0_i32 = arith.constant 0 : i32
    %c0_i32_0 = arith.constant 0 : i32
    return %arg0, %c0_i32 : i32, i32
  }
}

</mosaic_0001>

<llo_original>
// kernel: actor_forward.1
$region0: #{actor_forward.1}
  #allocation0 [shape = 'u32[]', space=smem, size = 0x4, offset = 0x4, fixed_abs, tag = 'smem constant byte address 0x4 - core index']
  #allocation1 [shape = 'u32[144,128]{1,0:T(1,128)}', space=vmem, size = 0x12000, scoped, tag = 'internal scratch']
  %s0 = inlined_call_operand.vmem [shape: f32[8,16], index: 0, kind: input, shape index: {}]
  %s1 = inlined_call_operand.vmem [shape: bf16[16,32], index: 1, kind: input, shape index: {}]
  %s2 = inlined_call_operand.vmem [shape: f32[1,32], index: 2, kind: input, shape index: {}]
  %s3 = inlined_call_operand.vmem [shape: bf16[32,32], index: 3, kind: input, shape index: {}]
  %s4 = inlined_call_operand.vmem [shape: f32[1,32], index: 4, kind: input, shape index: {}]
  %s5 = inlined_call_operand.vmem [shape: bf16[32,4], index: 5, kind: input, shape index: {}]
  %s6 = inlined_call_operand.vmem [shape: f32[1,4], index: 6, kind: input, shape index: {}]
  %s7 = inlined_call_operand.vmem [shape: f32[8,4], index: 7, kind: output, shape index: {}]
  %s8 = sld [smem:[#allocation0]]
  $region38: #{actor_forward.1} parent=0
    _
  %s10 = ssub.s32 1, %s8
  %s11 = scalar_select 0, %s10, %s8
  // Predicated region
  $region2: #{actor_forward.1} parent=0 // pred_check
    _
  $region3: #{actor_forward.1} parent=0 // pred_check_branch
    %13 = sbr.rel (0) target = $region5
  $region4: #{actor_forward.1} parent=0 // pred_region
    _
  $region5: #{actor_forward.1} parent=0 // pred_fallthru
    _
  // Predicated region
  $region6: #{actor_forward.1} parent=0 // pred_check
    _
  $region7: #{actor_forward.1} parent=0 // pred_check_branch
    %15 = sbr.rel (0) target = $region9
  $region8: #{actor_forward.1} parent=0 // pred_region
    _
  $region9: #{actor_forward.1} parent=0 // pred_fallthru
    _
  // Predicated region
  $region10: #{actor_forward.1} parent=0 // pred_check
    _
  $region11: #{actor_forward.1} parent=0 // pred_check_branch
    %17 = sbr.rel (0) target = $region13
  $region12: #{actor_forward.1} parent=0 // pred_region
    _
  $region13: #{actor_forward.1} parent=0 // pred_fallthru
    _
  // Predicated region
  $region14: #{actor_forward.1} parent=0 // pred_check
    _
  $region15: #{actor_forward.1} parent=0 // pred_check_branch
    %19 = sbr.rel (0) target = $region17
  $region16: #{actor_forward.1} parent=0 // pred_region
    _
  $region17: #{actor_forward.1} parent=0 // pred_fallthru
    _
  // Predicated region
  $region18: #{actor_forward.1} parent=0 // pred_check
    _
  $region19: #{actor_forward.1} parent=0 // pred_check_branch
    %21 = sbr.rel (0) target = $region21
  $region20: #{actor_forward.1} parent=0 // pred_region
    _
  $region21: #{actor_forward.1} parent=0 // pred_fallthru
    _
  // Predicated region
  $region22: #{actor_forward.1} parent=0 // pred_check
    _
  $region23: #{actor_forward.1} parent=0 // pred_check_branch
    %23 = sbr.rel (0) target = $region25
  $region24: #{actor_forward.1} parent=0 // pred_region
    _
  $region25: #{actor_forward.1} parent=0 // pred_fallthru
    _
  // Predicated region
  $region26: #{actor_forward.1} parent=0 // pred_check
    _
  $region27: #{actor_forward.1} parent=0 // pred_check_branch
    %25 = sbr.rel (0) target = $region29
  $region28: #{actor_forward.1} parent=0 // pred_region
    _
  $region29: #{actor_forward.1} parent=0 // pred_fallthru
    _
  %v27 = vld [vmem:[%s0] sm:$0xff]
  %v28 = vpack.c.bf16 %v27, %v27
  %v29 = vld [vmem:[%s1] sm:$0xf]
  %v30 = vld [vmem:[%s1 + $0x4] sm:$0xf]
  %v31 = vld [vmem:[%s2] sm:$0x1]
  %v33 = vlaneseq
  %v34 = vshrl.u32 %v33, 7
  %v35 = vsub.s32 0, %v34
  %v36 = vrot.slane %v31, %v35
  %v40 = vunpack.c.l.b16 %v29
  %v41 = vunpack.c.l.b16 %v30
  %v42 = vpack.c.b16 %v41, %v40
  %vm44 = vcmask 130048
  %v46 = vsel %vm44, %v28, 0
  %48 = vmatprep.subr.bf16.mxu0 0
  %49 = vmatpush1.bf16.msra.mxu0 %v42
  %50 = vmatprep.subr.bf16.mxu0 0
  %51 = vmatpush1.bf16.msra.mxu0 0
  %52 = vmatprep.subr.bf16.mxu0 0
  %53 = vmatpush1.bf16.msra.mxu0 0
  %54 = vmatprep.subr.bf16.mxu0 0
  %55 = vmatpush1.bf16.msra.mxu0 0
  %56 = vmatprep.subr.bf16.mxu0 0
  %57 = vmatpush1.bf16.msra.mxu0 0
  %58 = vmatprep.subr.bf16.mxu0 0
  %59 = vmatpush1.bf16.msra.mxu0 0
  %60 = vmatprep.subr.bf16.mxu0 0
  %61 = vmatpush1.bf16.msra.mxu0 0
  %62 = vmatprep.subr.bf16.mxu0 0
  %63 = vmatpush1.bf16.msra.mxu0 0
  %64 = vmatprep.subr.bf16.mxu0 0
  %65 = vmatpush1.bf16.msra.mxu0 0
  %66 = vmatprep.subr.bf16.mxu0 0
  %67 = vmatpush1.bf16.msra.mxu0 0
  %68 = vmatprep.subr.bf16.mxu0 0
  %69 = vmatpush1.bf16.msra.mxu0 0
  %70 = vmatprep.subr.bf16.mxu0 0
  %71 = vmatpush1.bf16.msra.mxu0 0
  %72 = vmatprep.subr.bf16.mxu0 0
  %73 = vmatpush1.bf16.msra.mxu0 0
  %74 = vmatprep.subr.bf16.mxu0 0
  %75 = vmatpush1.bf16.msra.mxu0 0
  %76 = vmatprep.subr.bf16.mxu0 0
  %77 = vmatpush1.bf16.msra.mxu0 0
  %78 = vmatprep.subr.bf16.mxu0 0
  %79 = vmatpush1.bf16.msra.mxu0 0
  %80 = vmatprep.mubr.bf16.mxu0 0
  %81 = vmatmul.mubr.bf16.gmra.mrb[0].mxu0 %v46
  %v82 = vpop.f32.mrb[0].mxu0
  %v83 = vadd.f32 %v36, %v82
  %v84 = vpop.f32.mrb[0].mxu0
  %v85 = vpop.f32.mrb[0].mxu0
  %v86 = vpop.f32.mrb[0].mxu0
  %87 = vdwg.mxu0
  %v88 = vtanh.pop %v83
  %v89 = vpack.c.bf16 %v88, %v88
  %v90 = vld [vmem:[%s3] sm:$0xf]
  %v91 = vld [vmem:[%s3 + $0x4] sm:$0xf]
  %v92 = vld [vmem:[%s3 + $0x8] sm:$0xf]
  %v93 = vld [vmem:[%s3 + $0xc] sm:$0xf]
  %v94 = vld [vmem:[%s4] sm:$0x1]
  %v96 = vlaneseq
  %v97 = vshrl.u32 %v96, 7
  %v98 = vsub.s32 0, %v97
  %v99 = vrot.slane %v94, %v98
  %v105 = vunpack.c.l.b16 %v90
  %v106 = vunpack.c.l.b16 %v91
  %v107 = vunpack.c.l.b16 %v92
  %v108 = vunpack.c.l.b16 %v93
  %v109 = vpack.c.b16 %v106, %v105
  %v110 = vpack.c.b16 %v108, %v107
  %vm113 = vcmask 261120
  %v115 = vsel %vm113, %v89, 0
  %117 = vmatprep.subr.bf16.mxu0 0
  %118 = vmatpush1.bf16.msra.mxu0 %v109
  %119 = vmatprep.subr.bf16.mxu0 0
  %120 = vmatpush1.bf16.msra.mxu0 %v110
  %121 = vmatprep.subr.bf16.mxu0 0
  %122 = vmatpush1.bf16.msra.mxu0 0
  %123 = vmatprep.subr.bf16.mxu0 0
  %124 = vmatpush1.bf16.msra.mxu0 0
  %125 = vmatprep.subr.bf16.mxu0 0
  %126 = vmatpush1.bf16.msra.mxu0 0
  %127 = vmatprep.subr.bf16.mxu0 0
  %128 = vmatpush1.bf16.msra.mxu0 0
  %129 = vmatprep.subr.bf16.mxu0 0
  %130 = vmatpush1.bf16.msra.mxu0 0
  %131 = vmatprep.subr.bf16.mxu0 0
  %132 = vmatpush1.bf16.msra.mxu0 0
  %133 = vmatprep.subr.bf16.mxu0 0
  %134 = vmatpush1.bf16.msra.mxu0 0
  %135 = vmatprep.subr.bf16.mxu0 0
  %136 = vmatpush1.bf16.msra.mxu0 0
  %137 = vmatprep.subr.bf16.mxu0 0
  %138 = vmatpush1.bf16.msra.mxu0 0
  %139 = vmatprep.subr.bf16.mxu0 0
  %140 = vmatpush1.bf16.msra.mxu0 0
  %141 = vmatprep.subr.bf16.mxu0 0
  %142 = vmatpush1.bf16.msra.mxu0 0
  %143 = vmatprep.subr.bf16.mxu0 0
  %144 = vmatpush1.bf16.msra.mxu0 0
  %145 = vmatprep.subr.bf16.mxu0 0
  %146 = vmatpush1.bf16.msra.mxu0 0
  %147 = vmatprep.subr.bf16.mxu0 0
  %148 = vmatpush1.bf16.msra.mxu0 0
  %149 = vmatprep.mubr.bf16.mxu0 0
  %150 = vmatmul.mubr.bf16.gmra.mrb[0].mxu0 %v115
  %v151 = vpop.f32.mrb[0].mxu0
  %v152 = vadd.f32 %v99, %v151
  %v153 = vpop.f32.mrb[0].mxu0
  %v154 = vpop.f32.mrb[0].mxu0
  %v155 = vpop.f32.mrb[0].mxu0
  %156 = vdwg.mxu0
  %v157 = vtanh.pop %v152
  %v158 = vpack.c.bf16 %v157, %v157
  %v159 = vld [vmem:[%s5] sm:$0xf]
  %v160 = vld [vmem:[%s5 + $0x4] sm:$0xf]
  %v161 = vld [vmem:[%s5 + $0x8] sm:$0xf]
  %v162 = vld [vmem:[%s5 + $0xc] sm:$0xf]
  %v163 = vld [vmem:[%s6] sm:$0x1]
  %v165 = vlaneseq
  %v166 = vshrl.u32 %v165, 7
  %v167 = vsub.s32 0, %v166
  %v168 = vrot.slane %v163, %v167
  %v174 = vunpack.c.l.b16 %v159
  %v175 = vunpack.c.l.b16 %v160
  %v176 = vunpack.c.l.b16 %v161
  %v177 = vunpack.c.l.b16 %v162
  %v178 = vpack.c.b16 %v175, %v174
  %v179 = vpack.c.b16 %v177, %v176
  %v183 = vsel %vm113, %v158, 0
  %185 = vmatprep.subr.bf16.mxu0 0
  %186 = vmatpush1.bf16.msra.mxu0 %v178
  %187 = vmatprep.subr.bf16.mxu0 0
  %188 = vmatpush1.bf16.msra.mxu0 %v179
  %189 = vmatprep.subr.bf16.mxu0 0
  %190 = vmatpush1.bf16.msra.mxu0 0
  %191 = vmatprep.subr.bf16.mxu0 0
  %192 = vmatpush1.bf16.msra.mxu0 0
  %193 = vmatprep.subr.bf16.mxu0 0
  %194 = vmatpush1.bf16.msra.mxu0 0
  %195 = vmatprep.subr.bf16.mxu0 0
  %196 = vmatpush1.bf16.msra.mxu0 0
  %197 = vmatprep.subr.bf16.mxu0 0
  %198 = vmatpush1.bf16.msra.mxu0 0
  %199 = vmatprep.subr.bf16.mxu0 0
  %200 = vmatpush1.bf16.msra.mxu0 0
  %201 = vmatprep.subr.bf16.mxu0 0
  %202 = vmatpush1.bf16.msra.mxu0 0
  %203 = vmatprep.subr.bf16.mxu0 0
  %204 = vmatpush1.bf16.msra.mxu0 0
  %205 = vmatprep.subr.bf16.mxu0 0
  %206 = vmatpush1.bf16.msra.mxu0 0
  %207 = vmatprep.subr.bf16.mxu0 0
  %208 = vmatpush1.bf16.msra.mxu0 0
  %209 = vmatprep.subr.bf16.mxu0 0
  %210 = vmatpush1.bf16.msra.mxu0 0
  %211 = vmatprep.subr.bf16.mxu0 0
  %212 = vmatpush1.bf16.msra.mxu0 0
  %213 = vmatprep.subr.bf16.mxu0 0
  %214 = vmatpush1.bf16.msra.mxu0 0
  %215 = vmatprep.subr.bf16.mxu0 0
  %216 = vmatpush1.bf16.msra.mxu0 0
  %217 = vmatprep.mubr.bf16.mxu0 0
  %218 = vmatmul.mubr.bf16.gmra.mrb[0].mxu0 %v183
  %v219 = vpop.f32.mrb[0].mxu0
  %v220 = vadd.f32 %v168, %v219
  %v221 = vpop.f32.mrb[0].mxu0
  %v222 = vpop.f32.mrb[0].mxu0
  %v223 = vpop.f32.mrb[0].mxu0
  %224 = vdwg.mxu0
  %vm225 = vcmask 31744
  %226 = vst.msk [vmem:[%s7] sm:$0xff] %vm225, %v220
  // Predicated region
  $region30: #{actor_forward.1} parent=0 // pred_check
    _
  $region31: #{actor_forward.1} parent=0 // pred_check_branch
    %228 = sbr.rel (0) target = $region33
  $region32: #{actor_forward.1} parent=0 // pred_region
    _
  $region33: #{actor_forward.1} parent=0 // pred_fallthru
    _
  // Predicated region
  $region34: #{actor_forward.1} parent=0 // pred_check
    _
  $region35: #{actor_forward.1} parent=0 // pred_check_branch
    %230 = sbr.rel (0) target = $region37
  $region36: #{actor_forward.1} parent=0 // pred_region
    _
  $region37: #{actor_forward.1} parent=0 // pred_fallthru
    _

</llo_original>
